<compile_context>
chip_gen: v6e
topology: v6e:2x2x1
jax: 0.10.0
libtpu: 0.0.40
codegen_flags: <defaults>
</compile_context>

<pallas_src>
import jax
import jax.numpy as jnp
from jax import lax
from jax.experimental import pallas as pl
from jax.experimental.pallas import tpu as pltpu


def _round_up(x, m):
    return (x + m - 1) // m * m


def _round_down(x, m):
    return x // m * m


def _dwgan_kernel(x_ref, w1_ref, b1_ref, w2_ref, b2_ref, w3_ref, b3_ref, o_ref):
    """One batch tile of the DWGAN forward pass.

    Shapes (batch on lanes for all intermediates):
      x_ref  : (tile_b, n_in)  f32   (natural PyTorch layout, streamed from HBM)
      w1_ref : (n_hid, n_in)   bf16  (resident)
      w2_ref : (n_hid, n_hid)  bf16  (resident)
      w3_ref : (n_hid, 1)      f32   (resident, used on the VPU)
      b1_ref : (n_hid, 1) f32, b2_ref: (n_hid, 1) f32, b3_ref: (1, 1) f32
      o_ref  : (1, tile_b)     f32   (lane-dense output tile)
    """
    # In-kernel cast of the streamed tile (VPU slot is idle in this mem-bound regime).
    xb = x_ref[...].astype(jnp.bfloat16)                       # (tile_b, n_in)

    # fc1: W1 @ x^T via dot_general contracting both minor dims (the q@k^T pattern),
    # so the batch lands on the lane axis without any wrapper-side transpose.
    h = lax.dot_general(
        w1_ref[...], xb, (((1,), (1,)), ((), ())),
        preferred_element_type=jnp.float32) + b1_ref[...]       # (n_hid, tile_b) f32
    h = jnp.where(h >= 0, h, 0.2 * h)                           # LeakyReLU(0.2)

    # fc2: bf16 x bf16 on the MXU (native path on v5e too), f32 accumulate,
    # bias + LeakyReLU in f32.
    h = jnp.dot(w2_ref[...], h.astype(jnp.bfloat16),
                preferred_element_type=jnp.float32) + b2_ref[...]
    h = jnp.where(h >= 0, h, 0.2 * h)                           # (n_hid, tile_b) f32

    # fc3 (single output feature): broadcast-multiply + sublane reduce on VPU/XLU
    # instead of an M=1 MXU matmul.
    y = jnp.sum(h * w3_ref[...], axis=0, keepdims=True) + b3_ref[...]
    o_ref[...] = y                                              # (1, tile_b) f32


_TARGET_TILE_BYTES = 2 * 1024 * 1024    # ~2 MiB of streamed x per buffer
_MIN_BIG_TILE_ROWS = 4096               # don't shrink tiles below this for grid>=8
_VMEM_LIMIT_BYTES = 32 * 1024 * 1024    # safe on v5e / v6e / v7x


@jax.jit
def dwgan_forward(x, w1, b1, w2, b2, w3, b3):
    """x: (B, n_in) f32; w_i: (out_features, in_features) f32 (PyTorch layout);
    b_i: (out_features,) f32.  Returns (B, 1) f32, matching DWGAN.forward."""
    B, n_in = x.shape
    n_hid = w1.shape[0]

    # ---- batch-tile sizing: byte budget, then grid-length heuristic ----
    budget_rows = max(128, _round_down(_TARGET_TILE_BYTES // (4 * n_in), 128))
    grid8_rows = max(_MIN_BIG_TILE_ROWS, _round_up(pl.cdiv(B, 8), 128))
    tile_b = max(128, min(budget_rows, grid8_rows))
    if B <= tile_b:
        tile_b = B                       # single full block; works for any B
    grid = (pl.cdiv(B, tile_b),)         # ragged last tile handled by Pallas masking

    # Tiny one-time casts/reshapes of the weights into their compute dtype/layout.
    w1b = w1.astype(jnp.bfloat16)                      # (n_hid, n_in)
    w2b = w2.astype(jnp.bfloat16)                      # (n_hid, n_hid)
    w3c = w3.reshape(n_hid, 1).astype(jnp.float32)     # column for lane broadcast
    b1c = b1.reshape(n_hid, 1).astype(jnp.float32)
    b2c = b2.reshape(n_hid, 1).astype(jnp.float32)
    b3c = b3.reshape(1, 1).astype(jnp.float32)

    # Weights/biases stay resident in VMEM (constant block index across the grid).
    resident = lambda a: pl.BlockSpec(a.shape, lambda i: (0, 0))

    flops = 2 * B * (n_in * n_hid + n_hid * n_hid + n_hid)
    bytes_accessed = (
        B * n_in * 4 + B * 4
        + (w1b.size + w2b.size) * 2
        + (w3c.size + b1c.size + b2c.size + b3c.size) * 4
    )

    out = pl.pallas_call(
        _dwgan_kernel,
        out_shape=jax.ShapeDtypeStruct((1, B), jnp.float32),
        grid=grid,
        in_specs=[
            pl.BlockSpec((tile_b, n_in), lambda i: (i, 0)),   # streamed x tiles
            resident(w1b), resident(b1c),
            resident(w2b), resident(b2c),
            resident(w3c), resident(b3c),
        ],
        out_specs=pl.BlockSpec((1, tile_b), lambda i: (0, i)),
        compiler_params=pltpu.CompilerParams(
            dimension_semantics=("parallel",),
            vmem_limit_bytes=_VMEM_LIMIT_BYTES),
        cost_estimate=pl.CostEstimate(
            flops=flops, transcendentals=0, bytes_accessed=bytes_accessed),
    )(x, w1b, b1c, w2b, b2c, w3c, b3c)

    return out.reshape(B, 1)


def init_params(key, n_in, n_hid):
    """Deterministic init mirroring torch.nn.Linear defaults; PyTorch-native layout."""
    ks = jax.random.split(key, 6)

    def linear(kw, kb, fan_in, fan_out):
        bound = 1.0 / jnp.sqrt(jnp.float32(fan_in))
        w = jax.random.uniform(kw, (fan_out, fan_in), jnp.float32, -bound, bound)
        b = jax.random.uniform(kb, (fan_out,), jnp.float32, -bound, bound)
        return w, b

    w1, b1 = linear(ks[0], ks[1], n_in, n_hid)
    w2, b2 = linear(ks[2], ks[3], n_hid, n_hid)
    w3, b3 = linear(ks[4], ks[5], n_hid, 1)
    return w1, b1, w2, b2, w3, b3


def dwgan_reference_f32(x, w1, b1, w2, b2, w3, b3):
    """Pure-f32 JAX reference matching the PyTorch forward exactly."""
    lrelu = lambda v: jnp.where(v >= 0, v, 0.2 * v)
    h = lrelu(x @ w1.T + b1)
    h = lrelu(h @ w2.T + b2)
    return h @ w3.T + b3


def dwgan_reference_quantized(x, w1, b1, w2, b2, w3, b3):
    """Reference applying the kernel's exact bf16 quantization choices."""
    f32 = jnp.float32
    lrelu = lambda v: jnp.where(v >= 0, v, 0.2 * v)
    h = lrelu(jnp.dot(x.astype(jnp.bfloat16), w1.astype(jnp.bfloat16).T,
                      preferred_element_type=f32) + b1)
    h = lrelu(jnp.dot(h.astype(jnp.bfloat16), w2.astype(jnp.bfloat16).T,
                      preferred_element_type=f32) + b2)
    return h @ w3.T + b3


if __name__ == "__main__":
    key = jax.random.PRNGKey(0)
    k_x, k_x2, k_p = jax.random.split(key, 3)

    n_in, n_hid = 32, 10
    params = init_params(k_p, n_in, n_hid)

    # Small case: single full block, grid = 1.
    B = 8
    x = jax.random.normal(k_x, (B, n_in), jnp.float32)
    out = jax.block_until_ready(dwgan_forward(x, *params))
    assert out.shape == (B, 1), out.shape
    ref_q = dwgan_reference_quantized(x, *params)
    ref_f = dwgan_reference_f32(x, *params)
    assert jnp.allclose(out, ref_q, atol=1e-4, rtol=1e-3), (out, ref_q)
    assert jnp.allclose(out, ref_f, atol=5e-2, rtol=5e-2), (out, ref_f)

    # Multi-tile case: exercises the streamed/pipelined grid and the ragged
    # (masked) last tile (tile_b = 4096, grid = 2, last tile partially out of bounds).
    B2 = 4500
    x2 = jax.random.normal(k_x2, (B2, n_in), jnp.float32)
    out2 = jax.block_until_ready(dwgan_forward(x2, *params))
    assert out2.shape == (B2, 1), out2.shape
    ref2_q = dwgan_reference_quantized(x2, *params)
    assert jnp.allclose(out2, ref2_q, atol=1e-4, rtol=1e-3)

    print("KERNEL_OK")
</pallas_src>

<mosaic_0001>
module attributes {stable_mosaic.version = 11 : i64} {
  func.func @_dwgan_kernel(%arg0: i32, %arg1: memref<8x32xf32, #tpu.memory_space<vmem>>, %arg2: memref<10x32xbf16, #tpu.memory_space<vmem>>, %arg3: memref<10x1xf32, #tpu.memory_space<vmem>>, %arg4: memref<10x10xbf16, #tpu.memory_space<vmem>>, %arg5: memref<10x1xf32, #tpu.memory_space<vmem>>, %arg6: memref<10x1xf32, #tpu.memory_space<vmem>>, %arg7: memref<1x1xf32, #tpu.memory_space<vmem>>, %arg8: memref<1x8xf32, #tpu.memory_space<vmem>>) attributes {dimension_semantics = [#tpu.dimension_semantics<parallel>], iteration_bounds = array<i64: 1>, scalar_prefetch = 0 : i64, scratch_operands = 0 : i64, tpu.core_type = #tpu.core_type<tc>, window_params = [{transform_indices = @transform_0, window_bounds = array<i64: 8, 32>}, {pipeline_mode = #tpu.pipeline_mode<synchronous>, transform_indices = @transform_1, window_bounds = array<i64: 10, 32>}, {pipeline_mode = #tpu.pipeline_mode<synchronous>, transform_indices = @transform_2, window_bounds = array<i64: 10, 1>}, {pipeline_mode = #tpu.pipeline_mode<synchronous>, transform_indices = @transform_3, window_bounds = array<i64: 10, 10>}, {pipeline_mode = #tpu.pipeline_mode<synchronous>, transform_indices = @transform_4, window_bounds = array<i64: 10, 1>}, {pipeline_mode = #tpu.pipeline_mode<synchronous>, transform_indices = @transform_5, window_bounds = array<i64: 10, 1>}, {pipeline_mode = #tpu.pipeline_mode<synchronous>, transform_indices = @transform_6, window_bounds = array<i64: 1, 1>}, {transform_indices = @transform_7, window_bounds = array<i64: 1, 8>}]} {
    %c0 = arith.constant 0 : index
    %c0_0 = arith.constant 0 : index
    %0 = vector.load %arg1[%c0, %c0_0] : memref<8x32xf32, #tpu.memory_space<vmem>>, vector<8x32xf32>
    %1 = arith.truncf %0 : vector<8x32xf32> to vector<8x32xbf16>
    %c0_1 = arith.constant 0 : index
    %c0_2 = arith.constant 0 : index
    %2 = vector.load %arg2[%c0_1, %c0_2] : memref<10x32xbf16, #tpu.memory_space<vmem>>, vector<10x32xbf16>
    %cst = arith.constant dense<0.000000e+00> : vector<10x8xf32>
    %3 = tpu.matmul %2, %1, %cst {dimension_numbers = #tpu.dot_dimension_numbers<[1], [1], [0], [0], [0, 0, 1, 0], [], []>} : vector<10x32xbf16>, vector<8x32xbf16>, vector<10x8xf32> -> vector<10x8xf32>
    %c0_3 = arith.constant 0 : index
    %c0_4 = arith.constant 0 : index
    %4 = vector.load %arg3[%c0_3, %c0_4] : memref<10x1xf32, #tpu.memory_space<vmem>>, vector<10x1xf32>
    %5 = vector.broadcast %4 : vector<10x1xf32> to vector<10x8xf32>
    %6 = arith.addf %3, %5 : vector<10x8xf32>
    %cst_5 = arith.constant 0.000000e+00 : f32
    %7 = vector.broadcast %cst_5 : f32 to vector<10x8xf32>
    %8 = arith.cmpf oge, %6, %7 : vector<10x8xf32>
    %cst_6 = arith.constant 2.000000e-01 : f32
    %9 = vector.broadcast %cst_6 : f32 to vector<10x8xf32>
    %10 = arith.mulf %9, %6 : vector<10x8xf32>
    %11 = arith.select %8, %6, %10 : vector<10x8xi1>, vector<10x8xf32>
    %c0_7 = arith.constant 0 : index
    %c0_8 = arith.constant 0 : index
    %12 = vector.load %arg4[%c0_7, %c0_8] : memref<10x10xbf16, #tpu.memory_space<vmem>>, vector<10x10xbf16>
    %13 = arith.truncf %11 : vector<10x8xf32> to vector<10x8xbf16>
    %cst_9 = arith.constant dense<0.000000e+00> : vector<10x8xf32>
    %14 = tpu.matmul %12, %13, %cst_9 {dimension_numbers = #tpu.dot_dimension_numbers<[1], [0], [0], [1], [0, 0, 1, 1], [], []>} : vector<10x10xbf16>, vector<10x8xbf16>, vector<10x8xf32> -> vector<10x8xf32>
    %c0_10 = arith.constant 0 : index
    %c0_11 = arith.constant 0 : index
    %15 = vector.load %arg5[%c0_10, %c0_11] : memref<10x1xf32, #tpu.memory_space<vmem>>, vector<10x1xf32>
    %16 = vector.broadcast %15 : vector<10x1xf32> to vector<10x8xf32>
    %17 = arith.addf %14, %16 : vector<10x8xf32>
    %cst_12 = arith.constant 0.000000e+00 : f32
    %18 = vector.broadcast %cst_12 : f32 to vector<10x8xf32>
    %19 = arith.cmpf oge, %17, %18 : vector<10x8xf32>
    %cst_13 = arith.constant 2.000000e-01 : f32
    %20 = vector.broadcast %cst_13 : f32 to vector<10x8xf32>
    %21 = arith.mulf %20, %17 : vector<10x8xf32>
    %22 = arith.select %19, %17, %21 : vector<10x8xi1>, vector<10x8xf32>
    %c0_14 = arith.constant 0 : index
    %c0_15 = arith.constant 0 : index
    %23 = vector.load %arg6[%c0_14, %c0_15] : memref<10x1xf32, #tpu.memory_space<vmem>>, vector<10x1xf32>
    %24 = vector.broadcast %23 : vector<10x1xf32> to vector<10x8xf32>
    %25 = arith.mulf %22, %24 : vector<10x8xf32>
    %cst_16 = arith.constant dense<0.000000e+00> : vector<8xf32>
    %26 = vector.multi_reduction <add>, %25, %cst_16 [0] : vector<10x8xf32> to vector<8xf32>
    %27 = vector.shape_cast %26 : vector<8xf32> to vector<1x8xf32>
    %c0_17 = arith.constant 0 : index
    %c0_18 = arith.constant 0 : index
    %28 = vector.load %arg7[%c0_17, %c0_18] : memref<1x1xf32, #tpu.memory_space<vmem>>, vector<1x1xf32>
    %29 = vector.broadcast %28 : vector<1x1xf32> to vector<1x8xf32>
    %30 = arith.addf %27, %29 : vector<1x8xf32>
    %c0_19 = arith.constant 0 : index
    %c0_20 = arith.constant 0 : index
    %31 = vector.load %arg8[%c0_19, %c0_20] : memref<1x8xf32, #tpu.memory_space<vmem>>, vector<1x8xf32>
    tpu.vector_store %arg8[%c0_19, %c0_20], %30 {strides = array<i32>} : memref<1x8xf32, #tpu.memory_space<vmem>>, vector<1x8xf32>,
    return
  }
  func.func @transform_0(%arg0: i32) -> (i32, i32) {
    %c0_i32 = arith.constant 0 : i32
    %c0_i32_0 = arith.constant 0 : i32
    return %arg0, %c0_i32 : i32, i32
  }
  func.func @transform_1(%arg0: i32) -> (i32, i32) {
    %c0_i32 = arith.constant 0 : i32
    %c0_i32_0 = arith.constant 0 : i32
    %c0_i32_1 = arith.constant 0 : i32
    return %c0_i32, %c0_i32_0 : i32, i32
  }
  func.func @transform_2(%arg0: i32) -> (i32, i32) {
    %c0_i32 = arith.constant 0 : i32
    %c0_i32_0 = arith.constant 0 : i32
    %c0_i32_1 = arith.constant 0 : i32
    return %c0_i32, %c0_i32_0 : i32, i32
  }
  func.func @transform_3(%arg0: i32) -> (i32, i32) {
    %c0_i32 = arith.constant 0 : i32
    %c0_i32_0 = arith.constant 0 : i32
    %c0_i32_1 = arith.constant 0 : i32
    return %c0_i32, %c0_i32_0 : i32, i32
  }
  func.func @transform_4(%arg0: i32) -> (i32, i32) {
    %c0_i32 = arith.constant 0 : i32
    %c0_i32_0 = arith.constant 0 : i32
    %c0_i32_1 = arith.constant 0 : i32
    return %c0_i32, %c0_i32_0 : i32, i32
  }
  func.func @transform_5(%arg0: i32) -> (i32, i32) {
    %c0_i32 = arith.constant 0 : i32
    %c0_i32_0 = arith.constant 0 : i32
    %c0_i32_1 = arith.constant 0 : i32
    return %c0_i32, %c0_i32_0 : i32, i32
  }
  func.func @transform_6(%arg0: i32) -> (i32, i32) {
    %c0_i32 = arith.constant 0 : i32
    %c0_i32_0 = arith.constant 0 : i32
    %c0_i32_1 = arith.constant 0 : i32
    return %c0_i32, %c0_i32_0 : i32, i32
  }
  func.func @transform_7(%arg0: i32) -> (i32, i32) {
    %c0_i32 = arith.constant 0 : i32
    %c0_i32_0 = arith.constant 0 : i32
    return %c0_i32, %arg0 : i32, i32
  }
}

</mosaic_0001>

<llo_original>
// kernel: dwgan_forward.1
$region0: #{dwgan_forward.1}
  #allocation0 [shape = 'u32[]', space=smem, size = 0x4, offset = 0x4, fixed_abs, tag = 'smem constant byte address 0x4 - core index']
  #allocation1 [shape = 'u32[144,128]{1,0:T(1,128)}', space=vmem, size = 0x12000, scoped, tag = 'internal scratch']
  #allocation2 [shape = 'f32[1,1]{1,0:T(1,128)S(1)}', space=vmem, size = 0x200, scoped, tag = 'scoped memory for dwgan_forward.1']
  %s0 = inlined_call_operand.vmem [shape: f32[8,32], index: 0, kind: input, shape index: {}]
  %s1 = inlined_call_operand.vmem [shape: bf16[10,32], index: 1, kind: input, shape index: {}]
  %s2 = inlined_call_operand.vmem [shape: f32[10,1], index: 2, kind: input, shape index: {}]
  %s3 = inlined_call_operand.vmem [shape: bf16[10,10], index: 3, kind: input, shape index: {}]
  %s4 = inlined_call_operand.vmem [shape: f32[10,1], index: 4, kind: input, shape index: {}]
  %s5 = inlined_call_operand.vmem [shape: f32[10,1], index: 5, kind: input, shape index: {}]
  %s6 = inlined_call_operand.<no memory space> [shape: f32[1,1], index: 6, kind: input, shape index: {}]
  %s7 = inlined_call_operand.hbm [shape: f32[1,8], index: 7, kind: output, shape index: {}]
  %s8 = sld [smem:[#allocation0]]
  $region38: #{dwgan_forward.1} parent=0
    _
  %s10 = ssub.s32 1, %s8
  %s11 = scalar_select 0, %s10, %s8
  %v12 = vstv %s6
  %13 = vst [vmem:[#allocation2] sm:$0x1] %v12
  $region1: #{dwgan_forward.1} parent=0
    #allocation3 [shape = 'u8[512]{0}', space=vmem, size = 0x400, scoped, tag = 'output window, operand 0, single buffered']
    #allocation4 [shape = 's32[1]{0}', space=sflag, size = 0x4, scoped, tag = 'scoped memory for dwgan_forward.1']
    %14 = vsyncpa [#allocation4], 0
    // Predicated region
    $region2: #{dwgan_forward.1} parent=1 // pred_check
      _
    $region3: #{dwgan_forward.1} parent=1 // pred_check_branch
      %16 = sbr.rel (0) target = $region5
    $region4: #{dwgan_forward.1} parent=1 // pred_region
      _
    $region5: #{dwgan_forward.1} parent=1 // pred_fallthru
      _
    // Predicated region
    $region6: #{dwgan_forward.1} parent=1 // pred_check
      _
    $region7: #{dwgan_forward.1} parent=1 // pred_check_branch
      %18 = sbr.rel (0) target = $region9
    $region8: #{dwgan_forward.1} parent=1 // pred_region
      _
    $region9: #{dwgan_forward.1} parent=1 // pred_fallthru
      _
    // Predicated region
    $region10: #{dwgan_forward.1} parent=1 // pred_check
      _
    $region11: #{dwgan_forward.1} parent=1 // pred_check_branch
      %20 = sbr.rel (0) target = $region13
    $region12: #{dwgan_forward.1} parent=1 // pred_region
      _
    $region13: #{dwgan_forward.1} parent=1 // pred_fallthru
      _
    // Predicated region
    $region14: #{dwgan_forward.1} parent=1 // pred_check
      _
    $region15: #{dwgan_forward.1} parent=1 // pred_check_branch
      %22 = sbr.rel (0) target = $region17
    $region16: #{dwgan_forward.1} parent=1 // pred_region
      _
    $region17: #{dwgan_forward.1} parent=1 // pred_fallthru
      _
    // Predicated region
    $region18: #{dwgan_forward.1} parent=1 // pred_check
      _
    $region19: #{dwgan_forward.1} parent=1 // pred_check_branch
      %24 = sbr.rel (0) target = $region21
    $region20: #{dwgan_forward.1} parent=1 // pred_region
      _
    $region21: #{dwgan_forward.1} parent=1 // pred_fallthru
      _
    // Predicated region
    $region22: #{dwgan_forward.1} parent=1 // pred_check
      _
    $region23: #{dwgan_forward.1} parent=1 // pred_check_branch
      %26 = sbr.rel (0) target = $region25
    $region24: #{dwgan_forward.1} parent=1 // pred_region
      _
    $region25: #{dwgan_forward.1} parent=1 // pred_fallthru
      _
    // Predicated region
    $region26: #{dwgan_forward.1} parent=1 // pred_check
      _
    $region27: #{dwgan_forward.1} parent=1 // pred_check_branch
      %28 = sbr.rel (0) target = $region29
    $region28: #{dwgan_forward.1} parent=1 // pred_region
      _
    $region29: #{dwgan_forward.1} parent=1 // pred_fallthru
      _
    %v30 = vld [vmem:[%s0] sm:$0xff]
    %v31 = vpack.c.bf16 %v30, %v30
    %v32 = vld [vmem:[%s1] sm:$0xf]
    %v33 = vld [vmem:[%s1 + $0x4] sm:$0x1]
    %v34 = vld [vmem:[%s2] sm:$0xff]
    %v35 = vld [vmem:[%s2 + $0x8] sm:$0x3]
    %37 = vset.pattern.permute.xlu0 0
    %38 = vperm.xlu0 %37, %v34
    %v39 = vpop.permute.xlu0 %38
    %42 = vset.pattern.permute.xlu0 0
    %43 = vperm.xlu0 %42, %v35
    %v44 = vpop.permute.xlu0 %43
    %v48 = vunpack.c.l.b16 %v32
    %v49 = vunpack.c.l.b16 %v33
    %v50 = vpack.c.b16 %v49, %v48
    %vm51 = vcmask 261120
    %v53 = vsel %vm51, %v50, 0
    %v56 = vsel %vm51, %v31, 0
    %58 = vmatprep.subr.bf16.mxu0 0
    %59 = vmatpush1.bf16.xpose.msra.mxu0 0
    %60 = vmatprep.subr.bf16.mxu0 0
    %61 = vmatpush1.bf16.xpose.msra.mxu0 0
    %62 = vmatprep.subr.bf16.mxu0 0
    %63 = vmatpush1.bf16.xpose.msra.mxu0 0
    %64 = vmatprep.subr.bf16.mxu0 0
    %65 = vmatpush1.bf16.xpose.msra.mxu0 0
    %66 = vmatprep.subr.bf16.mxu0 0
    %67 = vmatpush1.bf16.xpose.msra.mxu0 0
    %68 = vmatprep.subr.bf16.mxu0 0
    %69 = vmatpush1.bf16.xpose.msra.mxu0 0
    %70 = vmatprep.subr.bf16.mxu0 0
    %71 = vmatpush1.bf16.xpose.msra.mxu0 0
    %72 = vmatprep.subr.bf16.mxu0 0
    %73 = vmatpush1.bf16.xpose.msra.mxu0 %v56
    %74 = vmatprep.subr.bf16.mxu0 0
    %75 = vmatpush2.bf16.xpose.msra.mxu0 0
    %76 = vmatprep.subr.bf16.mxu0 0
    %77 = vmatpush2.bf16.xpose.msra.mxu0 0
    %78 = vmatprep.subr.bf16.mxu0 0
    %79 = vmatpush2.bf16.xpose.msra.mxu0 0
    %80 = vmatprep.subr.bf16.mxu0 0
    %81 = vmatpush2.bf16.xpose.msra.mxu0 0
    %82 = vmatprep.subr.bf16.mxu0 0
    %83 = vmatpush2.bf16.xpose.msra.mxu0 0
    %84 = vmatprep.subr.bf16.mxu0 0
    %85 = vmatpush2.bf16.xpose.msra.mxu0 0
    %86 = vmatprep.subr.bf16.mxu0 0
    %87 = vmatpush2.bf16.xpose.msra.mxu0 0
    %88 = vmatprep.subr.bf16.mxu0 0
    %89 = vmatpush2.bf16.xpose.msra.mxu0 0
    %90 = vmatprep.mubr.bf16.mxu0 0
    %91 = vmatmul.mubr.bf16.gmra.mxu0 %v53
    %v92 = vpop.f32.mrf.mxu0
    %v93 = vadd.f32 %v39, %v92
    %v94 = vpop.f32.mrf.mxu0
    %v95 = vpop.f32.mrf.mxu0
    %v96 = vadd.f32 %v44, %v95
    %v97 = vpop.f32.mrf.mxu0
    %98 = vdwg.mxu0
    %vm99 = vcmp.ge.f32.partialorder %v93, 0.0
    %vm100 = vcmp.ge.f32.partialorder %v96, 0.0
    %v101 = vmul.f32 %v93, 0.2
    %v102 = vmul.f32 %v96, 0.2
    %v103 = vsel %vm99, %v93, %v101
    %v104 = vsel %vm100, %v96, %v102
    %v105 = vld [vmem:[%s3] sm:$0xf]
    %v106 = vld [vmem:[%s3 + $0x4] sm:$0x1]
    %v107 = vpack.c.bf16 %v104, %v103
    %v108 = vld [vmem:[%s4] sm:$0xff]
    %v109 = vld [vmem:[%s4 + $0x8] sm:$0x3]
    %111 = vset.pattern.permute.xlu0 0
    %112 = vperm.xlu0 %111, %v108
    %v113 = vpop.permute.xlu0 %112
    %116 = vset.pattern.permute.xlu0 0
    %117 = vperm.xlu0 %116, %v109
    %v118 = vpop.permute.xlu0 %117
    %v122 = vunpack.c.l.b16 %v105
    %v123 = vunpack.c.l.b16 %v106
    %v124 = vpack.c.b16 %v123, %v122
    %vm125 = vcmask 80896
    %v127 = vsel %vm125, %v124, 0
    %vm129 = vcmask 1044480
    %v131 = vsel %vm129, %v107, 0
    %133 = vmatprep.subr.bf16.mxu0 0
    %134 = vmatpush1.bf16.msra.mxu0 0
    %135 = vmatprep.subr.bf16.mxu0 0
    %136 = vmatpush1.bf16.msra.mxu0 0
    %137 = vmatprep.subr.bf16.mxu0 0
    %138 = vmatpush1.bf16.msra.mxu0 0
    %139 = vmatprep.subr.bf16.mxu0 0
    %140 = vmatpush1.bf16.msra.mxu0 0
    %141 = vmatprep.subr.bf16.mxu0 0
    %142 = vmatpush1.bf16.msra.mxu0 0
    %143 = vmatprep.subr.bf16.mxu0 0
    %144 = vmatpush1.bf16.msra.mxu0 0
    %145 = vmatprep.subr.bf16.mxu0 0
    %146 = vmatpush1.bf16.msra.mxu0 0
    %147 = vmatprep.subr.bf16.mxu0 0
    %148 = vmatpush1.bf16.msra.mxu0 %v131
    %149 = vmatprep.subr.bf16.mxu0 0
    %150 = vmatpush2.bf16.msra.mxu0 0
    %151 = vmatprep.subr.bf16.mxu0 0
    %152 = vmatpush2.bf16.msra.mxu0 0
    %153 = vmatprep.subr.bf16.mxu0 0
    %154 = vmatpush2.bf16.msra.mxu0 0
    %155 = vmatprep.subr.bf16.mxu0 0
    %156 = vmatpush2.bf16.msra.mxu0 0
    %157 = vmatprep.subr.bf16.mxu0 0
    %158 = vmatpush2.bf16.msra.mxu0 0
    %159 = vmatprep.subr.bf16.mxu0 0
    %160 = vmatpush2.bf16.msra.mxu0 0
    %161 = vmatprep.subr.bf16.mxu0 0
    %162 = vmatpush2.bf16.msra.mxu0 0
    %163 = vmatprep.subr.bf16.mxu0 0
    %164 = vmatpush2.bf16.msra.mxu0 0
    %165 = vmatprep.mubr.bf16.mxu0 0
    %166 = vmatmul.mubr.bf16.gmra.mxu0 %v127
    %v167 = vpop.f32.mrf.mxu0
    %v168 = vadd.f32 %v113, %v167
    %v169 = vpop.f32.mrf.mxu0
    %v170 = vpop.f32.mrf.mxu0
    %v171 = vadd.f32 %v118, %v170
    %v172 = vpop.f32.mrf.mxu0
    %173 = vdwg.mxu0
    %vm174 = vcmp.ge.f32.partialorder %v168, 0.0
    %vm175 = vcmp.ge.f32.partialorder %v171, 0.0
    %v176 = vmul.f32 %v168, 0.2
    %v177 = vmul.f32 %v171, 0.2
    %v178 = vsel %vm174, %v168, %v176
    %v179 = vsel %vm175, %v171, %v177
    %v180 = vld [vmem:[%s5] sm:$0xff]
    %v181 = vld [vmem:[%s5 + $0x8] sm:$0x3]
    %183 = vset.pattern.permute.xlu0 0
    %184 = vperm.xlu0 %183, %v180
    %v185 = vpop.permute.xlu0 %184
    %188 = vset.pattern.permute.xlu0 0
    %189 = vperm.xlu0 %188, %v181
    %v190 = vpop.permute.xlu0 %189
    %v192 = vmul.f32 %v178, %v185
    %v193 = vmul.f32 %v179, %v190
    %vm194 = vcmask 64512
    %v195 = vsel %vm194, %v192, 0.0
    %vm196 = vcmask 58368
    %v197 = vsel %vm196, %v193, 0.0
    %v198 = vadd.f32 %v195, %v197
    %v199 = vrot.slane %v198, 4
    %v200 = vadd.f32 %v198, %v199
    %v201 = vrot.slane %v200, 2
    %v202 = vadd.f32 %v200, %v201
    %v203 = vrot.slane %v202, 1
    %v204 = vadd.f32 %v202, %v203
    %v205 = vld [vmem:[#allocation2] sm:$0x1]
    %207 = vset.pattern.permute.xlu0 0
    %208 = vperm.xlu0 %207, %v205
    %v209 = vpop.permute.xlu0 %208
    %v211 = vlaneseq
    %v212 = vshrl.u32 %v211, 7
    %v213 = vsub.s32 0, %v212
    %v214 = vrot.slane %v209, %v213
    %v215 = vadd.f32 %v204, %v214
    %vm216 = vcmask 57344
    %217 = vst.msk [vmem:[#allocation3] sm:$0x1] %vm216, %v215
    // Predicated region
    $region30: #{dwgan_forward.1} parent=1 // pred_check
      _
    $region31: #{dwgan_forward.1} parent=1 // pred_check_branch
      %219 = sbr.rel (0) target = $region33
    $region32: #{dwgan_forward.1} parent=1 // pred_region
      %s221 = ssub.s32 16, 16
      %222 = vsyncadd [#allocation4], %s221
      %s224 = sshll.u32 [#allocation3], 4
      %s225 = int_to_ptr.vmem [resolvable:$true] %s224
      %227 = dma.vmem_to_hbm [thread:$0]  %s225, 16, %s7, [#allocation4]
    $region33: #{dwgan_forward.1} parent=1 // pred_fallthru
      _
    // Predicated region
    $region34: #{dwgan_forward.1} parent=1 // pred_check
      _
    $region35: #{dwgan_forward.1} parent=1 // pred_check_branch
      %229 = sbr.rel (0) target = $region37
    $region36: #{dwgan_forward.1} parent=1 // pred_region
      %230 = dma.done [#allocation4], 16
    $region37: #{dwgan_forward.1} parent=1 // pred_fallthru
      _
    %231 = vsyncpa [#allocation4], 1

</llo_original>
